<compile_context>
chip_gen: v6e
topology: v6e:2x2x1
jax: 0.10.0
libtpu: 0.0.40
codegen_flags: <defaults>
</compile_context>

<pallas_src>
import functools

import jax
import jax.numpy as jnp
from jax import lax
from jax.experimental import pallas as pl
from jax.experimental.pallas import tpu as pltpu

_EPS = 1e-6


def sublayer_connection_kernel(x_ref, gamma_ref, beta_ref, w_ref, b_ref, o_ref):
    """One (tm, tn) output tile of  x + Linear(LayerNorm(x)).

    x_ref     : (tm, H)   row tile, full hidden width (needed for LN + matmul K dim)
    gamma_ref : (1, H)    LayerNorm a_2
    beta_ref  : (1, H)    LayerNorm b_2
    w_ref     : (H, tn)   column tile of the sublayer weight
    b_ref     : (1, tn)   column tile of the sublayer bias
    o_ref     : (tm, tn)
    """
    hidden = x_ref.shape[-1]
    tn = o_ref.shape[-1]
    j = pl.program_id(0)  # W-column block index (outer grid axis)

    # ---- LayerNorm in f32 (one materialized full-width temp; hides under MXU) ----
    x = x_ref[...].astype(jnp.float32)                       # (tm, H)
    mean = jnp.mean(x, axis=-1, keepdims=True)
    sq_mean = jnp.mean(x * x, axis=-1, keepdims=True)
    # spec: a_2*(x-mean)/sqrt(std**2+eps)+b_2, std unbiased (N-1)
    var_unbiased = jnp.maximum(sq_mean - mean * mean, 0.0) * (hidden / (hidden - 1.0))
    inv = lax.rsqrt(var_unbiased + _EPS)
    normed = ((x - mean) * inv) * gamma_ref[...].astype(jnp.float32) \
        + beta_ref[...].astype(jnp.float32)

    # ---- sublayer: Linear(H -> tn); matmul in W's native dtype, f32 accumulate ----
    sub = jnp.dot(normed.astype(w_ref.dtype), w_ref[...],
                  preferred_element_type=jnp.float32) + b_ref[...].astype(jnp.float32)

    # ---- dropout (eval mode) = identity; residual re-read from the resident
    # low-precision x tile (cheap vld) so the f32 copy of x is dead by now ----
    if tn == hidden:
        x_res = x_ref[...].astype(jnp.float32)
    else:
        start = pl.multiple_of(j * tn, 128)      # tn is a multiple of 128 when tn < hidden
        x_res = x_ref[:, pl.ds(start, tn)].astype(jnp.float32)

    o_ref[...] = (x_res + sub).astype(o_ref.dtype)


def _round_up(v, m):
    return ((v + m - 1) // m) * m


def _hw_params():
    """Returns (usable VMEM cap in bytes, MXU-friendly lane alignment)."""
    vmem_phys = 128 << 20
    try:
        vmem_phys = int(pltpu.get_tpu_info().vmem_capacity_bytes)
    except Exception:
        pass
    kind = ""
    try:
        kind = jax.devices()[0].device_kind.lower()
    except Exception:
        pass
    # v5e MXU is 128x128 (128-lane tiles fine); v6e/v7x MXUs are 256x256.
    lane_align = 128 if "v5" in kind else 256
    # ~25% headroom below physical VMEM for Mosaic internal scratch/semaphores:
    #   v7x: 64 MiB -> 48 MiB cap; v5e/v6e: 128 MiB -> 96 MiB cap.
    vmem_cap = (vmem_phys * 3) // 4
    return vmem_cap, lane_align


def _vmem_estimate(tm, tn, hidden, x_isz, w_isz, o_isz, single_buf_invariants):
    wb = 1 if single_buf_invariants else 2
    return (2 * tm * hidden * x_isz          # x row tiles (double-buffered)
            + 2 * tm * tn * o_isz            # output tiles (double-buffered)
            + wb * hidden * tn * w_isz       # weight column tile
            + wb * tn * w_isz                # bias column tile
            + wb * 2 * hidden * 4            # gamma / beta (f32 upper bound)
            + 2 * tm * hidden * 4            # f32 x + normed temporaries
            + 2 * tm * tn * 4)               # f32 matmul acc + residual temporaries


def sublayer_connection(x, gamma, beta, w, b, *, tm=256):
    """x: (batch, seq, hidden). Returns x + Linear(LayerNorm(x)) (dropout = eval/identity)."""
    batch, seq, hidden = x.shape
    rows = batch * seq
    x_isz = jnp.dtype(x.dtype).itemsize
    w_isz = jnp.dtype(w.dtype).itemsize
    o_isz = x_isz

    vmem_cap, lane_align = _hw_params()

    # Row tile aligned to packed-sublane granularity: f32 -> 8, bf16 -> 16, int8/fp8 -> 32.
    row_align = max(8, 32 // x_isz)
    tm = max(row_align, min(_round_up(tm, row_align), _round_up(rows, row_align)))
    tn = hidden

    def fits(tm_, tn_):
        return _vmem_estimate(tm_, tn_, hidden, x_isz, w_isz, o_isz, True) <= vmem_cap

    # Prefer shrinking the row tile (keeps W fully resident -> nj=1, so x is streamed
    # once and LayerNorm is computed once), then tile W columns, then shrink tm more.
    while not fits(tm, tn) and tm > max(128, row_align):
        tm = max(row_align, _round_up(tm // 2, row_align))
    while not fits(tm, tn) and tn % 2 == 0 and (tn // 2) % lane_align == 0:
        tn //= 2
    while not fits(tm, tn) and tm > row_align:
        tm = max(row_align, _round_up(tm // 2, row_align))
    assert hidden % tn == 0

    ni = pl.cdiv(rows, tm)      # row blocks (inner axis; Pallas masks the tail block)
    nj = hidden // tn           # W column blocks (outer axis -> W resident across rows)

    # No host-side padding / slicing: tail-block rows contain unspecified data but the
    # per-row LN/matmul never mixes rows and Pallas discards the out-of-range writeback.
    x2 = x.reshape(rows, hidden)
    gamma2 = gamma.reshape(1, hidden)
    beta2 = beta.reshape(1, hidden)
    b2 = b.reshape(1, hidden)

    est = _vmem_estimate(tm, tn, hidden, x_isz, w_isz, o_isz, True)
    vmem_limit = int(min(max(int(est * 1.25), 32 << 20), vmem_cap))

    def run(single_buffer_invariants):
        if single_buffer_invariants:
            # Grid-invariant (or outer-axis-only) operands don't need double buffers.
            inv_spec = functools.partial(pl.BlockSpec, pipeline_mode=pl.Buffered(1))
        else:
            inv_spec = pl.BlockSpec
        call = pl.pallas_call(
            sublayer_connection_kernel,
            out_shape=jax.ShapeDtypeStruct((rows, hidden), x.dtype),
            grid_spec=pltpu.PrefetchScalarGridSpec(
                num_scalar_prefetch=0,
                grid=(nj, ni),
                in_specs=[
                    pl.BlockSpec((tm, hidden), lambda j, i: (i, 0)),   # x row tile
                    inv_spec((1, hidden), lambda j, i: (0, 0)),        # gamma
                    inv_spec((1, hidden), lambda j, i: (0, 0)),        # beta
                    inv_spec((hidden, tn), lambda j, i: (0, j)),       # W column tile
                    inv_spec((1, tn), lambda j, i: (0, j)),            # bias column tile
                ],
                out_specs=pl.BlockSpec((tm, tn), lambda j, i: (i, j)),
            ),
            compiler_params=pltpu.CompilerParams(
                # Only the row axis is megacore-parallel; splitting W columns across
                # the two TCs would duplicate x HBM reads per chip.
                dimension_semantics=("arbitrary", "parallel"),
                vmem_limit_bytes=vmem_limit,
            ),
        )
        return jax.block_until_ready(call(x2, gamma2, beta2, w, b2))

    try:
        out = run(True)         # single-buffered invariants (saves VMEM)
    except Exception:
        out = run(False)        # safe fallback: default double-buffering

    return out.reshape(batch, seq, hidden)


def reference(x, gamma, beta, w, b):
    """Pure-JAX reference mirroring the module's numerics (f32 LN, native-dtype matmul)."""
    h = x.shape[-1]
    xf = x.astype(jnp.float32)
    mean = jnp.mean(xf, axis=-1, keepdims=True)
    centered = xf - mean
    var_unbiased = jnp.sum(centered * centered, axis=-1, keepdims=True) / (h - 1)
    normed = gamma.astype(jnp.float32) * centered * lax.rsqrt(var_unbiased + _EPS) \
        + beta.astype(jnp.float32)
    sub = jnp.dot(normed.astype(w.dtype), w, preferred_element_type=jnp.float32) \
        + b.astype(jnp.float32)
    return (xf + sub).astype(x.dtype)


if __name__ == "__main__":
    # Lane-dense hidden (multiple of 128), bf16 activations/weights (MXU-native path).
    batch, seq, hidden = 2, 8, 128

    key = jax.random.PRNGKey(0)
    kx, kw, kb = jax.random.split(key, 3)

    x = jax.random.normal(kx, (batch, seq, hidden), dtype=jnp.float32).astype(jnp.bfloat16)

    # LayerNorm params exactly as in __init__: ones / zeros
    gamma = jnp.ones((hidden,), dtype=jnp.float32)
    beta = jnp.zeros((hidden,), dtype=jnp.float32)

    # Deterministic synthetic sublayer (Linear hidden->hidden), bf16 weights
    w = (jax.random.normal(kw, (hidden, hidden), dtype=jnp.float32) * 0.05).astype(jnp.bfloat16)
    b = (jax.random.normal(kb, (hidden,), dtype=jnp.float32) * 0.01).astype(jnp.bfloat16)

    out = sublayer_connection(x, gamma, beta, w, b)
    out = jax.block_until_ready(out)

    ref = reference(x, gamma, beta, w, b)
    assert out.shape == x.shape and out.dtype == x.dtype
    err = float(jnp.max(jnp.abs(out.astype(jnp.float32) - ref.astype(jnp.float32))))
    assert err <= 5e-2, err

    print("KERNEL_OK")
</pallas_src>

<mosaic_0001>
module attributes {stable_mosaic.version = 11 : i64} {
  func.func @sublayer_connection_kernel(%arg0: i32, %arg1: i32, %arg2: memref<16x128xbf16, #tpu.memory_space<vmem>>, %arg3: memref<1x128xf32, #tpu.memory_space<vmem>>, %arg4: memref<1x128xf32, #tpu.memory_space<vmem>>, %arg5: memref<128x128xbf16, #tpu.memory_space<vmem>>, %arg6: memref<1x128xbf16, #tpu.memory_space<vmem>>, %arg7: memref<16x128xbf16, #tpu.memory_space<vmem>>) attributes {dimension_semantics = [#tpu.dimension_semantics<arbitrary>, #tpu.dimension_semantics<parallel>], iteration_bounds = array<i64: 1, 1>, scalar_prefetch = 0 : i64, scratch_operands = 0 : i64, tpu.core_type = #tpu.core_type<tc>, window_params = [{transform_indices = @transform_0, window_bounds = array<i64: 16, 128>}, {pipeline_mode = #tpu.pipeline_mode<synchronous>, transform_indices = @transform_1, window_bounds = array<i64: 1, 128>}, {pipeline_mode = #tpu.pipeline_mode<synchronous>, transform_indices = @transform_2, window_bounds = array<i64: 1, 128>}, {pipeline_mode = #tpu.pipeline_mode<synchronous>, transform_indices = @transform_3, window_bounds = array<i64: 128, 128>}, {pipeline_mode = #tpu.pipeline_mode<synchronous>, transform_indices = @transform_4, window_bounds = array<i64: 1, 128>}, {transform_indices = @transform_5, window_bounds = array<i64: 16, 128>}]} {
    %c0 = arith.constant 0 : index
    %c0_0 = arith.constant 0 : index
    %0 = vector.load %arg2[%c0, %c0_0] : memref<16x128xbf16, #tpu.memory_space<vmem>>, vector<16x128xbf16>
    %1 = arith.extf %0 : vector<16x128xbf16> to vector<16x128xf32>
    %cst = arith.constant dense<0.000000e+00> : vector<16xf32>
    %2 = vector.multi_reduction <add>, %1, %cst [1] : vector<16x128xf32> to vector<16xf32>
    %3 = vector.shape_cast %2 : vector<16xf32> to vector<16x1xf32>
    %cst_1 = arith.constant 1.280000e+02 : f32
    %4 = vector.broadcast %cst_1 : f32 to vector<16x1xf32>
    %5 = arith.divf %3, %4 : vector<16x1xf32>
    %6 = arith.mulf %1, %1 : vector<16x128xf32>
    %cst_2 = arith.constant dense<0.000000e+00> : vector<16xf32>
    %7 = vector.multi_reduction <add>, %6, %cst_2 [1] : vector<16x128xf32> to vector<16xf32>
    %8 = vector.shape_cast %7 : vector<16xf32> to vector<16x1xf32>
    %cst_3 = arith.constant 1.280000e+02 : f32
    %9 = vector.broadcast %cst_3 : f32 to vector<16x1xf32>
    %10 = arith.divf %8, %9 : vector<16x1xf32>
    %11 = arith.mulf %5, %5 : vector<16x1xf32>
    %12 = arith.subf %10, %11 : vector<16x1xf32>
    %cst_4 = arith.constant 0.000000e+00 : f32
    %13 = vector.broadcast %cst_4 : f32 to vector<16x1xf32>
    %14 = arith.maximumf %12, %13 : vector<16x1xf32>
    %cst_5 = arith.constant 1.00787401 : f32
    %15 = vector.broadcast %cst_5 : f32 to vector<16x1xf32>
    %16 = arith.mulf %14, %15 : vector<16x1xf32>
    %cst_6 = arith.constant 9.99999997E-7 : f32
    %17 = vector.broadcast %cst_6 : f32 to vector<16x1xf32>
    %18 = arith.addf %16, %17 : vector<16x1xf32>
    %19 = math.rsqrt %18 : vector<16x1xf32>
    %20 = vector.broadcast %5 : vector<16x1xf32> to vector<16x128xf32>
    %21 = arith.subf %1, %20 : vector<16x128xf32>
    %22 = vector.broadcast %19 : vector<16x1xf32> to vector<16x128xf32>
    %23 = arith.mulf %21, %22 : vector<16x128xf32>
    %c0_7 = arith.constant 0 : index
    %c0_8 = arith.constant 0 : index
    %24 = vector.load %arg3[%c0_7, %c0_8] : memref<1x128xf32, #tpu.memory_space<vmem>>, vector<1x128xf32>
    %25 = vector.broadcast %24 : vector<1x128xf32> to vector<16x128xf32>
    %26 = arith.mulf %23, %25 : vector<16x128xf32>
    %c0_9 = arith.constant 0 : index
    %c0_10 = arith.constant 0 : index
    %27 = vector.load %arg4[%c0_9, %c0_10] : memref<1x128xf32, #tpu.memory_space<vmem>>, vector<1x128xf32>
    %28 = vector.broadcast %27 : vector<1x128xf32> to vector<16x128xf32>
    %29 = arith.addf %26, %28 : vector<16x128xf32>
    %30 = arith.truncf %29 : vector<16x128xf32> to vector<16x128xbf16>
    %c0_11 = arith.constant 0 : index
    %c0_12 = arith.constant 0 : index
    %31 = vector.load %arg5[%c0_11, %c0_12] : memref<128x128xbf16, #tpu.memory_space<vmem>>, vector<128x128xbf16>
    %cst_13 = arith.constant dense<0.000000e+00> : vector<16x128xf32>
    %32 = tpu.matmul %30, %31, %cst_13 {dimension_numbers = #tpu.dot_dimension_numbers<[1], [0], [0], [1], [0, 0, 1, 1], [], []>} : vector<16x128xbf16>, vector<128x128xbf16>, vector<16x128xf32> -> vector<16x128xf32>
    %c0_14 = arith.constant 0 : index
    %c0_15 = arith.constant 0 : index
    %33 = vector.load %arg6[%c0_14, %c0_15] : memref<1x128xbf16, #tpu.memory_space<vmem>>, vector<1x128xbf16>
    %34 = arith.extf %33 : vector<1x128xbf16> to vector<1x128xf32>
    %35 = vector.broadcast %34 : vector<1x128xf32> to vector<16x128xf32>
    %36 = arith.addf %32, %35 : vector<16x128xf32>
    %c0_16 = arith.constant 0 : index
    %c0_17 = arith.constant 0 : index
    %37 = vector.load %arg2[%c0_16, %c0_17] : memref<16x128xbf16, #tpu.memory_space<vmem>>, vector<16x128xbf16>
    %38 = arith.extf %37 : vector<16x128xbf16> to vector<16x128xf32>
    %39 = arith.addf %38, %36 : vector<16x128xf32>
    %40 = arith.truncf %39 : vector<16x128xf32> to vector<16x128xbf16>
    %c0_18 = arith.constant 0 : index
    %c0_19 = arith.constant 0 : index
    %41 = vector.load %arg7[%c0_18, %c0_19] : memref<16x128xbf16, #tpu.memory_space<vmem>>, vector<16x128xbf16>
    tpu.vector_store %arg7[%c0_18, %c0_19], %40 {strides = array<i32>} : memref<16x128xbf16, #tpu.memory_space<vmem>>, vector<16x128xbf16>,
    return
  }
  func.func @transform_0(%arg0: i32, %arg1: i32) -> (i32, i32) {
    %c0_i32 = arith.constant 0 : i32
    %c0_i32_0 = arith.constant 0 : i32
    return %arg1, %c0_i32 : i32, i32
  }
  func.func @transform_1(%arg0: i32, %arg1: i32) -> (i32, i32) {
    %c0_i32 = arith.constant 0 : i32
    %c0_i32_0 = arith.constant 0 : i32
    %c0_i32_1 = arith.constant 0 : i32
    return %c0_i32, %c0_i32_0 : i32, i32
  }
  func.func @transform_2(%arg0: i32, %arg1: i32) -> (i32, i32) {
    %c0_i32 = arith.constant 0 : i32
    %c0_i32_0 = arith.constant 0 : i32
    %c0_i32_1 = arith.constant 0 : i32
    return %c0_i32, %c0_i32_0 : i32, i32
  }
  func.func @transform_3(%arg0: i32, %arg1: i32) -> (i32, i32) {
    %c0_i32 = arith.constant 0 : i32
    %c0_i32_0 = arith.constant 0 : i32
    return %c0_i32, %arg0 : i32, i32
  }
  func.func @transform_4(%arg0: i32, %arg1: i32) -> (i32, i32) {
    %c0_i32 = arith.constant 0 : i32
    %c0_i32_0 = arith.constant 0 : i32
    return %c0_i32, %arg0 : i32, i32
  }
  func.func @transform_5(%arg0: i32, %arg1: i32) -> (i32, i32) {
    %c0_i32 = arith.constant 0 : i32
    return %arg1, %arg0 : i32, i32
  }
}

module attributes {stable_mosaic.version = 11 : i64} {
  func.func @sublayer_connection_kernel(%arg0: i32, %arg1: i32, %arg2: memref<16x128xbf16, #tpu.memory_space<vmem>>, %arg3: memref<1x128xf32, #tpu.memory_space<vmem>>, %arg4: memref<1x128xf32, #tpu.memory_space<vmem>>, %arg5: memref<128x128xbf16, #tpu.memory_space<vmem>>, %arg6: memref<1x128xbf16, #tpu.memory_space<vmem>>, %arg7: memref<16x128xbf16, #tpu.memory_space<vmem>>) attributes {dimension_semantics = [#tpu.dimension_semantics<arbitrary>, #tpu.dimension_semantics<parallel>], iteration_bounds = array<i64: 1, 1>, scalar_prefetch = 0 : i64, scratch_operands = 0 : i64, tpu.core_type = #tpu.core_type<tc>, window_params = [{transform_indices = @transform_0, window_bounds = array<i64: 16, 128>}, {pipeline_mode = #tpu.pipeline_mode<synchronous>, transform_indices = @transform_1, window_bounds = array<i64: 1, 128>}, {pipeline_mode = #tpu.pipeline_mode<synchronous>, transform_indices = @transform_2, window_bounds = array<i64: 1, 128>}, {transform_indices = @transform_3, window_bounds = array<i64: 128, 128>}, {transform_indices = @transform_4, window_bounds = array<i64: 1, 128>}, {transform_indices = @transform_5, window_bounds = array<i64: 16, 128>}]} {
    %c0 = arith.constant 0 : index
    %c0_0 = arith.constant 0 : index
    %0 = vector.load %arg2[%c0, %c0_0] : memref<16x128xbf16, #tpu.memory_space<vmem>>, vector<16x128xbf16>
    %1 = arith.extf %0 : vector<16x128xbf16> to vector<16x128xf32>
    %cst = arith.constant dense<0.000000e+00> : vector<16xf32>
    %2 = vector.multi_reduction <add>, %1, %cst [1] : vector<16x128xf32> to vector<16xf32>
    %3 = vector.shape_cast %2 : vector<16xf32> to vector<16x1xf32>
    %cst_1 = arith.constant 1.280000e+02 : f32
    %4 = vector.broadcast %cst_1 : f32 to vector<16x1xf32>
    %5 = arith.divf %3, %4 : vector<16x1xf32>
    %6 = arith.mulf %1, %1 : vector<16x128xf32>
    %cst_2 = arith.constant dense<0.000000e+00> : vector<16xf32>
    %7 = vector.multi_reduction <add>, %6, %cst_2 [1] : vector<16x128xf32> to vector<16xf32>
    %8 = vector.shape_cast %7 : vector<16xf32> to vector<16x1xf32>
    %cst_3 = arith.constant 1.280000e+02 : f32
    %9 = vector.broadcast %cst_3 : f32 to vector<16x1xf32>
    %10 = arith.divf %8, %9 : vector<16x1xf32>
    %11 = arith.mulf %5, %5 : vector<16x1xf32>
    %12 = arith.subf %10, %11 : vector<16x1xf32>
    %cst_4 = arith.constant 0.000000e+00 : f32
    %13 = vector.broadcast %cst_4 : f32 to vector<16x1xf32>
    %14 = arith.maximumf %12, %13 : vector<16x1xf32>
    %cst_5 = arith.constant 1.00787401 : f32
    %15 = vector.broadcast %cst_5 : f32 to vector<16x1xf32>
    %16 = arith.mulf %14, %15 : vector<16x1xf32>
    %cst_6 = arith.constant 9.99999997E-7 : f32
    %17 = vector.broadcast %cst_6 : f32 to vector<16x1xf32>
    %18 = arith.addf %16, %17 : vector<16x1xf32>
    %19 = math.rsqrt %18 : vector<16x1xf32>
    %20 = vector.broadcast %5 : vector<16x1xf32> to vector<16x128xf32>
    %21 = arith.subf %1, %20 : vector<16x128xf32>
    %22 = vector.broadcast %19 : vector<16x1xf32> to vector<16x128xf32>
    %23 = arith.mulf %21, %22 : vector<16x128xf32>
    %c0_7 = arith.constant 0 : index
    %c0_8 = arith.constant 0 : index
    %24 = vector.load %arg3[%c0_7, %c0_8] : memref<1x128xf32, #tpu.memory_space<vmem>>, vector<1x128xf32>
    %25 = vector.broadcast %24 : vector<1x128xf32> to vector<16x128xf32>
    %26 = arith.mulf %23, %25 : vector<16x128xf32>
    %c0_9 = arith.constant 0 : index
    %c0_10 = arith.constant 0 : index
    %27 = vector.load %arg4[%c0_9, %c0_10] : memref<1x128xf32, #tpu.memory_space<vmem>>, vector<1x128xf32>
    %28 = vector.broadcast %27 : vector<1x128xf32> to vector<16x128xf32>
    %29 = arith.addf %26, %28 : vector<16x128xf32>
    %30 = arith.truncf %29 : vector<16x128xf32> to vector<16x128xbf16>
    %c0_11 = arith.constant 0 : index
    %c0_12 = arith.constant 0 : index
    %31 = vector.load %arg5[%c0_11, %c0_12] : memref<128x128xbf16, #tpu.memory_space<vmem>>, vector<128x128xbf16>
    %cst_13 = arith.constant dense<0.000000e+00> : vector<16x128xf32>
    %32 = tpu.matmul %30, %31, %cst_13 {dimension_numbers = #tpu.dot_dimension_numbers<[1], [0], [0], [1], [0, 0, 1, 1], [], []>} : vector<16x128xbf16>, vector<128x128xbf16>, vector<16x128xf32> -> vector<16x128xf32>
    %c0_14 = arith.constant 0 : index
    %c0_15 = arith.constant 0 : index
    %33 = vector.load %arg6[%c0_14, %c0_15] : memref<1x128xbf16, #tpu.memory_space<vmem>>, vector<1x128xbf16>
    %34 = arith.extf %33 : vector<1x128xbf16> to vector<1x128xf32>
    %35 = vector.broadcast %34 : vector<1x128xf32> to vector<16x128xf32>
    %36 = arith.addf %32, %35 : vector<16x128xf32>
    %c0_16 = arith.constant 0 : index
    %c0_17 = arith.constant 0 : index
    %37 = vector.load %arg2[%c0_16, %c0_17] : memref<16x128xbf16, #tpu.memory_space<vmem>>, vector<16x128xbf16>
    %38 = arith.extf %37 : vector<16x128xbf16> to vector<16x128xf32>
    %39 = arith.addf %38, %36 : vector<16x128xf32>
    %40 = arith.truncf %39 : vector<16x128xf32> to vector<16x128xbf16>
    %c0_18 = arith.constant 0 : index
    %c0_19 = arith.constant 0 : index
    %41 = vector.load %arg7[%c0_18, %c0_19] : memref<16x128xbf16, #tpu.memory_space<vmem>>, vector<16x128xbf16>
    tpu.vector_store %arg7[%c0_18, %c0_19], %40 {strides = array<i32>} : memref<16x128xbf16, #tpu.memory_space<vmem>>, vector<16x128xbf16>,
    return
  }
  func.func @transform_0(%arg0: i32, %arg1: i32) -> (i32, i32) {
    %c0_i32 = arith.constant 0 : i32
    %c0_i32_0 = arith.constant 0 : i32
    return %arg1, %c0_i32 : i32, i32
  }
  func.func @transform_1(%arg0: i32, %arg1: i32) -> (i32, i32) {
    %c0_i32 = arith.constant 0 : i32
    %c0_i32_0 = arith.constant 0 : i32
    %c0_i32_1 = arith.constant 0 : i32
    return %c0_i32, %c0_i32_0 : i32, i32
  }
  func.func @transform_2(%arg0: i32, %arg1: i32) -> (i32, i32) {
    %c0_i32 = arith.constant 0 : i32
    %c0_i32_0 = arith.constant 0 : i32
    %c0_i32_1 = arith.constant 0 : i32
    return %c0_i32, %c0_i32_0 : i32, i32
  }
  func.func @transform_3(%arg0: i32, %arg1: i32) -> (i32, i32) {
    %c0_i32 = arith.constant 0 : i32
    %c0_i32_0 = arith.constant 0 : i32
    return %c0_i32, %arg0 : i32, i32
  }
  func.func @transform_4(%arg0: i32, %arg1: i32) -> (i32, i32) {
    %c0_i32 = arith.constant 0 : i32
    %c0_i32_0 = arith.constant 0 : i32
    return %c0_i32, %arg0 : i32, i32
  }
  func.func @transform_5(%arg0: i32, %arg1: i32) -> (i32, i32) {
    %c0_i32 = arith.constant 0 : i32
    return %arg1, %arg0 : i32, i32
  }
}

</mosaic_0001>

<llo_original>
// kernel: tpu_custom_call.1
$region0: #{tpu_custom_call.1}
  #allocation0 [shape = 'u32[]', space=smem, size = 0x4, offset = 0x4, fixed_abs, tag = 'smem constant byte address 0x4 - core index']
  #allocation1 [shape = 'u32[144,128]{1,0:T(1,128)}', space=vmem, size = 0x12000, scoped, tag = 'internal scratch']
  %s0 = inlined_call_operand.hbm [shape: bf16[16,128], index: 0, kind: input, shape index: {}]
  %s1 = inlined_call_operand.vmem [shape: f32[1,128], index: 1, kind: input, shape index: {}]
  %s2 = inlined_call_operand.vmem [shape: f32[1,128], index: 2, kind: input, shape index: {}]
  %s3 = inlined_call_operand.hbm [shape: bf16[128,128], index: 3, kind: input, shape index: {}]
  %s4 = inlined_call_operand.vmem [shape: bf16[1,128], index: 4, kind: input, shape index: {}]
  %s5 = inlined_call_operand.hbm [shape: bf16[16,128], index: 5, kind: output, shape index: {}]
  %s6 = sld [smem:[#allocation0]]
  $region38: #{tpu_custom_call.1} parent=0
    _
  %s8 = ssub.s32 1, %s6
  %s9 = scalar_select 0, %s8, %s6
  $region1: #{tpu_custom_call.1} parent=0
    #allocation2 [shape = 'u8[4096]{0}', space=vmem, size = 0x1000, scoped, tag = 'input window, operand 0, single buffered']
    #allocation3 [shape = 's32[1]{0}', space=sflag, size = 0x4, scoped, tag = 'scoped memory for tpu_custom_call.1']
    #allocation4 [shape = 's32[1]{0}', space=sflag, size = 0x4, scoped, tag = 'scoped memory for tpu_custom_call.1']
    #allocation5 [shape = 'u8[32768]{0}', space=vmem, size = 0x8000, scoped, tag = 'input window, operand 3, single buffered']
    #allocation6 [shape = 's32[1]{0}', space=sflag, size = 0x4, scoped, tag = 'scoped memory for tpu_custom_call.1']
    #allocation7 [shape = 'u8[4096]{0}', space=vmem, size = 0x1000, scoped, tag = 'output window, operand 0, single buffered']
    %10 = vsyncpa [#allocation3], 0
    %11 = vsyncpa [#allocation6], 0
    %12 = vsyncpa [#allocation4], 0
    // Predicated region
    $region2: #{tpu_custom_call.1} parent=1 // pred_check
      _
    $region3: #{tpu_custom_call.1} parent=1 // pred_check_branch
      %14 = sbr.rel (0) target = $region5
    $region4: #{tpu_custom_call.1} parent=1 // pred_region
      %s16 = ssub.s32 128, 128
      %17 = vsyncadd [#allocation3], %s16
      %s18 = sshll.u32 [#allocation2], 4
      %s19 = int_to_ptr.vmem [resolvable:$true] %s18
      %24 = dma.hbm_to_vmem [thread:$0]  %s0, 128, %s19, [#allocation3], 64, 64, 4
    $region5: #{tpu_custom_call.1} parent=1 // pred_fallthru
      _
    // Predicated region
    $region6: #{tpu_custom_call.1} parent=1 // pred_check
      _
    $region7: #{tpu_custom_call.1} parent=1 // pred_check_branch
      %26 = sbr.rel (0) target = $region9
    $region8: #{tpu_custom_call.1} parent=1 // pred_region
      _
    $region9: #{tpu_custom_call.1} parent=1 // pred_fallthru
      _
    // Predicated region
    $region10: #{tpu_custom_call.1} parent=1 // pred_check
      _
    $region11: #{tpu_custom_call.1} parent=1 // pred_check_branch
      %28 = sbr.rel (0) target = $region13
    $region12: #{tpu_custom_call.1} parent=1 // pred_region
      _
    $region13: #{tpu_custom_call.1} parent=1 // pred_fallthru
      _
    // Predicated region
    $region14: #{tpu_custom_call.1} parent=1 // pred_check
      _
    $region15: #{tpu_custom_call.1} parent=1 // pred_check_branch
      %30 = sbr.rel (0) target = $region17
    $region16: #{tpu_custom_call.1} parent=1 // pred_region
      %s32 = ssub.s32 1024, 1024
      %33 = vsyncadd [#allocation6], %s32
      %s34 = sshll.u32 [#allocation5], 4
      %s35 = int_to_ptr.vmem [resolvable:$true] %s34
      %40 = dma.hbm_to_vmem [thread:$0]  %s3, 1024, %s35, [#allocation6], 64, 64, 4
    $region17: #{tpu_custom_call.1} parent=1 // pred_fallthru
      _
    // Predicated region
    $region18: #{tpu_custom_call.1} parent=1 // pred_check
      _
    $region19: #{tpu_custom_call.1} parent=1 // pred_check_branch
      %42 = sbr.rel (0) target = $region21
    $region20: #{tpu_custom_call.1} parent=1 // pred_region
      _
    $region21: #{tpu_custom_call.1} parent=1 // pred_fallthru
      _
    // Predicated region
    $region22: #{tpu_custom_call.1} parent=1 // pred_check
      _
    $region23: #{tpu_custom_call.1} parent=1 // pred_check_branch
      %44 = sbr.rel (0) target = $region25
    $region24: #{tpu_custom_call.1} parent=1 // pred_region
      %45 = dma.done [#allocation3], 128
    $region25: #{tpu_custom_call.1} parent=1 // pred_fallthru
      _
    // Predicated region
    $region26: #{tpu_custom_call.1} parent=1 // pred_check
      _
    $region27: #{tpu_custom_call.1} parent=1 // pred_check_branch
      %47 = sbr.rel (0) target = $region29
    $region28: #{tpu_custom_call.1} parent=1 // pred_region
      %48 = dma.done [#allocation6], 1024
    $region29: #{tpu_custom_call.1} parent=1 // pred_fallthru
      _
    %v50 = vld [vmem:[#allocation2] sm:$0xf]
    %v51 = vld [vmem:[#allocation2 + $0x4] sm:$0xf]
    %v52 = vunpack.c.l.bf16 %v50
    %v53 = vunpack.c.l.bf16 %v51
    %54 = vadd.xlane.f32.xlu0 %v52
    %v55 = vpop.xlane.xlu0 %54
    %56 = vadd.xlane.f32.xlu0 %v53
    %v57 = vpop.xlane.xlu0 %56
    %v58 = vrcp.pop 128.0
    %v59 = vmul.f32 %v55, %v58
    %v60 = vmul.f32 %v57, %v58
    %v61 = vmul.f32 %v52, %v52
    %v62 = vmul.f32 %v53, %v53
    %63 = vadd.xlane.f32.xlu0 %v61
    %v64 = vpop.xlane.xlu0 %63
    %65 = vadd.xlane.f32.xlu0 %v62
    %v66 = vpop.xlane.xlu0 %65
    %v67 = vmul.f32 %v64, %v58
    %v68 = vmul.f32 %v66, %v58
    %v69 = vmul.f32 %v59, %v59
    %v70 = vmul.f32 %v60, %v60
    %v71 = vsub.f32 %v67, %v69
    %v72 = vsub.f32 %v68, %v70
    %v73 = vmax.f32 %v71, 0.0
    %v74 = vmax.f32 %v72, 0.0
    %v75 = vmul.f32 %v73, 1.007874
    %v76 = vmul.f32 %v74, 1.007874
    %v77 = vadd.f32 %v75, 1e-06
    %v78 = vadd.f32 %v76, 1e-06
    %v79 = vrsqrt.pop %v77
    %v80 = vrsqrt.pop %v78
    %v81 = vsub.f32 %v52, %v59
    %v82 = vsub.f32 %v53, %v60
    %v83 = vmul.f32 %v81, %v79
    %v84 = vmul.f32 %v82, %v80
    %v85 = vld [vmem:[%s1] sm:$0x1]
    %v87 = vlaneseq
    %v88 = vshrl.u32 %v87, 7
    %v89 = vsub.s32 0, %v88
    %v90 = vrot.slane %v85, %v89
    %v92 = vmul.f32 %v83, %v90
    %v93 = vmul.f32 %v84, %v90
    %v94 = vld [vmem:[%s2] sm:$0x1]
    %v96 = vlaneseq
    %v97 = vshrl.u32 %v96, 7
    %v98 = vsub.s32 0, %v97
    %v99 = vrot.slane %v94, %v98
    %v101 = vadd.f32 %v92, %v99
    %v102 = vadd.f32 %v93, %v99
    %v103 = vpack.c.bf16 %v102, %v101
    %v104 = vld [vmem:[#allocation5] sm:$0xf]
    %v105 = vld [vmem:[#allocation5 + $0x4] sm:$0xf]
    %v106 = vld [vmem:[#allocation5 + $0x8] sm:$0xf]
    %v107 = vld [vmem:[#allocation5 + $0xc] sm:$0xf]
    %v108 = vld [vmem:[#allocation5 + $0x10] sm:$0xf]
    %v109 = vld [vmem:[#allocation5 + $0x14] sm:$0xf]
    %v110 = vld [vmem:[#allocation5 + $0x18] sm:$0xf]
    %v111 = vld [vmem:[#allocation5 + $0x1c] sm:$0xf]
    %v112 = vld [vmem:[#allocation5 + $0x20] sm:$0xf]
    %v113 = vld [vmem:[#allocation5 + $0x24] sm:$0xf]
    %v114 = vld [vmem:[#allocation5 + $0x28] sm:$0xf]
    %v115 = vld [vmem:[#allocation5 + $0x2c] sm:$0xf]
    %v116 = vld [vmem:[#allocation5 + $0x30] sm:$0xf]
    %v117 = vld [vmem:[#allocation5 + $0x34] sm:$0xf]
    %v118 = vld [vmem:[#allocation5 + $0x38] sm:$0xf]
    %v119 = vld [vmem:[#allocation5 + $0x3c] sm:$0xf]
    %v120 = vld [vmem:[%s4] sm:$0x1]
    %v121 = vunpack.c.l.bf16 %v120
    %v122 = vlaneseq
    %v123 = vshrl.u32 %v122, 7
    %v124 = vsub.s32 0, %v123
    %v125 = vrot.slane %v121, %v124
    %v142 = vunpack.c.l.b16 %v104
    %v143 = vunpack.c.l.b16 %v105
    %v144 = vunpack.c.l.b16 %v106
    %v145 = vunpack.c.l.b16 %v107
    %v146 = vunpack.c.l.b16 %v108
    %v147 = vunpack.c.l.b16 %v109
    %v148 = vunpack.c.l.b16 %v110
    %v149 = vunpack.c.l.b16 %v111
    %v150 = vunpack.c.l.b16 %v112
    %v151 = vunpack.c.l.b16 %v113
    %v152 = vunpack.c.l.b16 %v114
    %v153 = vunpack.c.l.b16 %v115
    %v154 = vunpack.c.l.b16 %v116
    %v155 = vunpack.c.l.b16 %v117
    %v156 = vunpack.c.l.b16 %v118
    %v157 = vunpack.c.l.b16 %v119
    %v158 = vpack.c.b16 %v143, %v142
    %v159 = vpack.c.b16 %v145, %v144
    %v160 = vpack.c.b16 %v147, %v146
    %v161 = vpack.c.b16 %v149, %v148
    %v162 = vpack.c.b16 %v151, %v150
    %v163 = vpack.c.b16 %v153, %v152
    %v164 = vpack.c.b16 %v155, %v154
    %v165 = vpack.c.b16 %v157, %v156
    %174 = vmatprep.subr.bf16.mxu0 0
    %175 = vmatpush1.bf16.msra.mxu0 %v165
    %176 = vmatprep.subr.bf16.mxu0 0
    %177 = vmatpush1.bf16.msra.mxu0 %v164
    %178 = vmatprep.subr.bf16.mxu0 0
    %179 = vmatpush1.bf16.msra.mxu0 %v163
    %180 = vmatprep.subr.bf16.mxu0 0
    %181 = vmatpush1.bf16.msra.mxu0 %v162
    %182 = vmatprep.subr.bf16.mxu0 0
    %183 = vmatpush1.bf16.msra.mxu0 %v161
    %184 = vmatprep.subr.bf16.mxu0 0
    %185 = vmatpush1.bf16.msra.mxu0 %v160
    %186 = vmatprep.subr.bf16.mxu0 0
    %187 = vmatpush1.bf16.msra.mxu0 %v159
    %188 = vmatprep.subr.bf16.mxu0 0
    %189 = vmatpush1.bf16.msra.mxu0 %v158
    %190 = vmatprep.subr.bf16.mxu0 0
    %191 = vmatpush2.bf16.msra.mxu0 0
    %192 = vmatprep.subr.bf16.mxu0 0
    %193 = vmatpush2.bf16.msra.mxu0 0
    %194 = vmatprep.subr.bf16.mxu0 0
    %195 = vmatpush2.bf16.msra.mxu0 0
    %196 = vmatprep.subr.bf16.mxu0 0
    %197 = vmatpush2.bf16.msra.mxu0 0
    %198 = vmatprep.subr.bf16.mxu0 0
    %199 = vmatpush2.bf16.msra.mxu0 0
    %200 = vmatprep.subr.bf16.mxu0 0
    %201 = vmatpush2.bf16.msra.mxu0 0
    %202 = vmatprep.subr.bf16.mxu0 0
    %203 = vmatpush2.bf16.msra.mxu0 0
    %204 = vmatprep.subr.bf16.mxu0 0
    %205 = vmatpush2.bf16.msra.mxu0 0
    %206 = vmatprep.mubr.bf16.mxu0 0
    %207 = vmatmul.mubr.bf16.gmra.mxu0 %v103
    %v208 = vpop.f32.mrf.mxu0
    %v209 = vadd.f32 %v125, %v208
    %v210 = vpop.f32.mrf.mxu0
    %v211 = vpop.f32.mrf.mxu0
    %v212 = vadd.f32 %v125, %v211
    %v213 = vpop.f32.mrf.mxu0
    %214 = vdwg.mxu0
    %v215 = vadd.f32 %v52, %v209
    %v216 = vadd.f32 %v53, %v212
    %v217 = vpack.c.bf16 %v216, %v215
    %v219 = vunpack.c.l.b16 %v217
    %v220 = vunpack.c.h.b16 %v217
    %v221 = vpack.c.b16 %v219, %v219
    %v222 = vpack.c.b16 %v220, %v220
    %225 = vst [vmem:[#allocation7] sm:$0xf] %v221
    %226 = vst [vmem:[#allocation7 + $0x4] sm:$0xf] %v222
    // Predicated region
    $region30: #{tpu_custom_call.1} parent=1 // pred_check
      _
    $region31: #{tpu_custom_call.1} parent=1 // pred_check_branch
      %228 = sbr.rel (0) target = $region33
    $region32: #{tpu_custom_call.1} parent=1 // pred_region
      %s230 = ssub.s32 128, 128
      %231 = vsyncadd [#allocation4], %s230
      %s232 = sshll.u32 [#allocation7], 4
      %s233 = int_to_ptr.vmem [resolvable:$true] %s232
      %238 = dma.vmem_to_hbm [thread:$0]  %s233, 128, %s5, [#allocation4], 64, 64, 4
    $region33: #{tpu_custom_call.1} parent=1 // pred_fallthru
      _
    // Predicated region
    $region34: #{tpu_custom_call.1} parent=1 // pred_check
      _
    $region35: #{tpu_custom_call.1} parent=1 // pred_check_branch
      %240 = sbr.rel (0) target = $region37
    $region36: #{tpu_custom_call.1} parent=1 // pred_region
      %241 = dma.done [#allocation4], 128
    $region37: #{tpu_custom_call.1} parent=1 // pred_fallthru
      _
    %242 = vsyncpa [#allocation3], 1
    %243 = vsyncpa [#allocation6], 1
    %244 = vsyncpa [#allocation4], 1

// kernel: tpu_custom_call.1
$region0: #{tpu_custom_call.1}
  #allocation0 [shape = 'u32[]', space=smem, size = 0x4, offset = 0x4, fixed_abs, tag = 'smem constant byte address 0x4 - core index']
  #allocation1 [shape = 'u32[144,128]{1,0:T(1,128)}', space=vmem, size = 0x12000, scoped, tag = 'internal scratch']
  %s0 = inlined_call_operand.hbm [shape: bf16[16,128], index: 0, kind: input, shape index: {}]
  %s1 = inlined_call_operand.vmem [shape: f32[1,128], index: 1, kind: input, shape index: {}]
  %s2 = inlined_call_operand.vmem [shape: f32[1,128], index: 2, kind: input, shape index: {}]
  %s3 = inlined_call_operand.hbm [shape: bf16[128,128], index: 3, kind: input, shape index: {}]
  %s4 = inlined_call_operand.vmem [shape: bf16[1,128], index: 4, kind: input, shape index: {}]
  %s5 = inlined_call_operand.hbm [shape: bf16[16,128], index: 5, kind: output, shape index: {}]
  %s6 = sld [smem:[#allocation0]]
  $region38: #{tpu_custom_call.1} parent=0
    _
  %s8 = ssub.s32 1, %s6
  %s9 = scalar_select 0, %s8, %s6
  $region1: #{tpu_custom_call.1} parent=0
    #allocation2 [shape = 'u8[4096]{0}', space=vmem, size = 0x1000, scoped, tag = 'input window, operand 0, single buffered']
    #allocation3 [shape = 's32[1]{0}', space=sflag, size = 0x4, scoped, tag = 'scoped memory for tpu_custom_call.1']
    #allocation4 [shape = 's32[1]{0}', space=sflag, size = 0x4, scoped, tag = 'scoped memory for tpu_custom_call.1']
    #allocation5 [shape = 'u8[32768]{0}', space=vmem, size = 0x8000, scoped, tag = 'input window, operand 3, single buffered']
    #allocation6 [shape = 's32[1]{0}', space=sflag, size = 0x4, scoped, tag = 'scoped memory for tpu_custom_call.1']
    #allocation7 [shape = 'u8[4096]{0}', space=vmem, size = 0x1000, scoped, tag = 'output window, operand 0, single buffered']
    %10 = vsyncpa [#allocation3], 0
    %11 = vsyncpa [#allocation6], 0
    %12 = vsyncpa [#allocation4], 0
    // Predicated region
    $region2: #{tpu_custom_call.1} parent=1 // pred_check
      _
    $region3: #{tpu_custom_call.1} parent=1 // pred_check_branch
      %14 = sbr.rel (0) target = $region5
    $region4: #{tpu_custom_call.1} parent=1 // pred_region
      %s16 = ssub.s32 128, 128
      %17 = vsyncadd [#allocation3], %s16
      %s18 = sshll.u32 [#allocation2], 4
      %s19 = int_to_ptr.vmem [resolvable:$true] %s18
      %24 = dma.hbm_to_vmem [thread:$0]  %s0, 128, %s19, [#allocation3], 64, 64, 4
    $region5: #{tpu_custom_call.1} parent=1 // pred_fallthru
      _
    // Predicated region
    $region6: #{tpu_custom_call.1} parent=1 // pred_check
      _
    $region7: #{tpu_custom_call.1} parent=1 // pred_check_branch
      %26 = sbr.rel (0) target = $region9
    $region8: #{tpu_custom_call.1} parent=1 // pred_region
      _
    $region9: #{tpu_custom_call.1} parent=1 // pred_fallthru
      _
    // Predicated region
    $region10: #{tpu_custom_call.1} parent=1 // pred_check
      _
    $region11: #{tpu_custom_call.1} parent=1 // pred_check_branch
      %28 = sbr.rel (0) target = $region13
    $region12: #{tpu_custom_call.1} parent=1 // pred_region
      _
    $region13: #{tpu_custom_call.1} parent=1 // pred_fallthru
      _
    // Predicated region
    $region14: #{tpu_custom_call.1} parent=1 // pred_check
      _
    $region15: #{tpu_custom_call.1} parent=1 // pred_check_branch
      %30 = sbr.rel (0) target = $region17
    $region16: #{tpu_custom_call.1} parent=1 // pred_region
      %s32 = ssub.s32 1024, 1024
      %33 = vsyncadd [#allocation6], %s32
      %s34 = sshll.u32 [#allocation5], 4
      %s35 = int_to_ptr.vmem [resolvable:$true] %s34
      %40 = dma.hbm_to_vmem [thread:$0]  %s3, 1024, %s35, [#allocation6], 64, 64, 4
    $region17: #{tpu_custom_call.1} parent=1 // pred_fallthru
      _
    // Predicated region
    $region18: #{tpu_custom_call.1} parent=1 // pred_check
      _
    $region19: #{tpu_custom_call.1} parent=1 // pred_check_branch
      %42 = sbr.rel (0) target = $region21
    $region20: #{tpu_custom_call.1} parent=1 // pred_region
      _
    $region21: #{tpu_custom_call.1} parent=1 // pred_fallthru
      _
    // Predicated region
    $region22: #{tpu_custom_call.1} parent=1 // pred_check
      _
    $region23: #{tpu_custom_call.1} parent=1 // pred_check_branch
      %44 = sbr.rel (0) target = $region25
    $region24: #{tpu_custom_call.1} parent=1 // pred_region
      %45 = dma.done [#allocation3], 128
    $region25: #{tpu_custom_call.1} parent=1 // pred_fallthru
      _
    // Predicated region
    $region26: #{tpu_custom_call.1} parent=1 // pred_check
      _
    $region27: #{tpu_custom_call.1} parent=1 // pred_check_branch
      %47 = sbr.rel (0) target = $region29
    $region28: #{tpu_custom_call.1} parent=1 // pred_region
      %48 = dma.done [#allocation6], 1024
    $region29: #{tpu_custom_call.1} parent=1 // pred_fallthru
      _
    %v50 = vld [vmem:[#allocation2] sm:$0xf]
    %v51 = vld [vmem:[#allocation2 + $0x4] sm:$0xf]
    %v52 = vunpack.c.l.bf16 %v50
    %v53 = vunpack.c.l.bf16 %v51
    %54 = vadd.xlane.f32.xlu0 %v52
    %v55 = vpop.xlane.xlu0 %54
    %56 = vadd.xlane.f32.xlu0 %v53
    %v57 = vpop.xlane.xlu0 %56
    %v58 = vrcp.pop 128.0
    %v59 = vmul.f32 %v55, %v58
    %v60 = vmul.f32 %v57, %v58
    %v61 = vmul.f32 %v52, %v52
    %v62 = vmul.f32 %v53, %v53
    %63 = vadd.xlane.f32.xlu0 %v61
    %v64 = vpop.xlane.xlu0 %63
    %65 = vadd.xlane.f32.xlu0 %v62
    %v66 = vpop.xlane.xlu0 %65
    %v67 = vmul.f32 %v64, %v58
    %v68 = vmul.f32 %v66, %v58
    %v69 = vmul.f32 %v59, %v59
    %v70 = vmul.f32 %v60, %v60
    %v71 = vsub.f32 %v67, %v69
    %v72 = vsub.f32 %v68, %v70
    %v73 = vmax.f32 %v71, 0.0
    %v74 = vmax.f32 %v72, 0.0
    %v75 = vmul.f32 %v73, 1.007874
    %v76 = vmul.f32 %v74, 1.007874
    %v77 = vadd.f32 %v75, 1e-06
    %v78 = vadd.f32 %v76, 1e-06
    %v79 = vrsqrt.pop %v77
    %v80 = vrsqrt.pop %v78
    %v81 = vsub.f32 %v52, %v59
    %v82 = vsub.f32 %v53, %v60
    %v83 = vmul.f32 %v81, %v79
    %v84 = vmul.f32 %v82, %v80
    %v85 = vld [vmem:[%s1] sm:$0x1]
    %v87 = vlaneseq
    %v88 = vshrl.u32 %v87, 7
    %v89 = vsub.s32 0, %v88
    %v90 = vrot.slane %v85, %v89
    %v92 = vmul.f32 %v83, %v90
    %v93 = vmul.f32 %v84, %v90
    %v94 = vld [vmem:[%s2] sm:$0x1]
    %v96 = vlaneseq
    %v97 = vshrl.u32 %v96, 7
    %v98 = vsub.s32 0, %v97
    %v99 = vrot.slane %v94, %v98
    %v101 = vadd.f32 %v92, %v99
    %v102 = vadd.f32 %v93, %v99
    %v103 = vpack.c.bf16 %v102, %v101
    %v104 = vld [vmem:[#allocation5] sm:$0xf]
    %v105 = vld [vmem:[#allocation5 + $0x4] sm:$0xf]
    %v106 = vld [vmem:[#allocation5 + $0x8] sm:$0xf]
    %v107 = vld [vmem:[#allocation5 + $0xc] sm:$0xf]
    %v108 = vld [vmem:[#allocation5 + $0x10] sm:$0xf]
    %v109 = vld [vmem:[#allocation5 + $0x14] sm:$0xf]
    %v110 = vld [vmem:[#allocation5 + $0x18] sm:$0xf]
    %v111 = vld [vmem:[#allocation5 + $0x1c] sm:$0xf]
    %v112 = vld [vmem:[#allocation5 + $0x20] sm:$0xf]
    %v113 = vld [vmem:[#allocation5 + $0x24] sm:$0xf]
    %v114 = vld [vmem:[#allocation5 + $0x28] sm:$0xf]
    %v115 = vld [vmem:[#allocation5 + $0x2c] sm:$0xf]
    %v116 = vld [vmem:[#allocation5 + $0x30] sm:$0xf]
    %v117 = vld [vmem:[#allocation5 + $0x34] sm:$0xf]
    %v118 = vld [vmem:[#allocation5 + $0x38] sm:$0xf]
    %v119 = vld [vmem:[#allocation5 + $0x3c] sm:$0xf]
    %v120 = vld [vmem:[%s4] sm:$0x1]
    %v121 = vunpack.c.l.bf16 %v120
    %v122 = vlaneseq
    %v123 = vshrl.u32 %v122, 7
    %v124 = vsub.s32 0, %v123
    %v125 = vrot.slane %v121, %v124
    %v142 = vunpack.c.l.b16 %v104
    %v143 = vunpack.c.l.b16 %v105
    %v144 = vunpack.c.l.b16 %v106
    %v145 = vunpack.c.l.b16 %v107
    %v146 = vunpack.c.l.b16 %v108
    %v147 = vunpack.c.l.b16 %v109
    %v148 = vunpack.c.l.b16 %v110
    %v149 = vunpack.c.l.b16 %v111
    %v150 = vunpack.c.l.b16 %v112
    %v151 = vunpack.c.l.b16 %v113
    %v152 = vunpack.c.l.b16 %v114
    %v153 = vunpack.c.l.b16 %v115
    %v154 = vunpack.c.l.b16 %v116
    %v155 = vunpack.c.l.b16 %v117
    %v156 = vunpack.c.l.b16 %v118
    %v157 = vunpack.c.l.b16 %v119
    %v158 = vpack.c.b16 %v143, %v142
    %v159 = vpack.c.b16 %v145, %v144
    %v160 = vpack.c.b16 %v147, %v146
    %v161 = vpack.c.b16 %v149, %v148
    %v162 = vpack.c.b16 %v151, %v150
    %v163 = vpack.c.b16 %v153, %v152
    %v164 = vpack.c.b16 %v155, %v154
    %v165 = vpack.c.b16 %v157, %v156
    %174 = vmatprep.subr.bf16.mxu0 0
    %175 = vmatpush1.bf16.msra.mxu0 %v165
    %176 = vmatprep.subr.bf16.mxu0 0
    %177 = vmatpush1.bf16.msra.mxu0 %v164
    %178 = vmatprep.subr.bf16.mxu0 0
    %179 = vmatpush1.bf16.msra.mxu0 %v163
    %180 = vmatprep.subr.bf16.mxu0 0
    %181 = vmatpush1.bf16.msra.mxu0 %v162
    %182 = vmatprep.subr.bf16.mxu0 0
    %183 = vmatpush1.bf16.msra.mxu0 %v161
    %184 = vmatprep.subr.bf16.mxu0 0
    %185 = vmatpush1.bf16.msra.mxu0 %v160
    %186 = vmatprep.subr.bf16.mxu0 0
    %187 = vmatpush1.bf16.msra.mxu0 %v159
    %188 = vmatprep.subr.bf16.mxu0 0
    %189 = vmatpush1.bf16.msra.mxu0 %v158
    %190 = vmatprep.subr.bf16.mxu0 0
    %191 = vmatpush2.bf16.msra.mxu0 0
    %192 = vmatprep.subr.bf16.mxu0 0
    %193 = vmatpush2.bf16.msra.mxu0 0
    %194 = vmatprep.subr.bf16.mxu0 0
    %195 = vmatpush2.bf16.msra.mxu0 0
    %196 = vmatprep.subr.bf16.mxu0 0
    %197 = vmatpush2.bf16.msra.mxu0 0
    %198 = vmatprep.subr.bf16.mxu0 0
    %199 = vmatpush2.bf16.msra.mxu0 0
    %200 = vmatprep.subr.bf16.mxu0 0
    %201 = vmatpush2.bf16.msra.mxu0 0
    %202 = vmatprep.subr.bf16.mxu0 0
    %203 = vmatpush2.bf16.msra.mxu0 0
    %204 = vmatprep.subr.bf16.mxu0 0
    %205 = vmatpush2.bf16.msra.mxu0 0
    %206 = vmatprep.mubr.bf16.mxu0 0
    %207 = vmatmul.mubr.bf16.gmra.mxu0 %v103
    %v208 = vpop.f32.mrf.mxu0
    %v209 = vadd.f32 %v125, %v208
    %v210 = vpop.f32.mrf.mxu0
    %v211 = vpop.f32.mrf.mxu0
    %v212 = vadd.f32 %v125, %v211
    %v213 = vpop.f32.mrf.mxu0
    %214 = vdwg.mxu0
    %v215 = vadd.f32 %v52, %v209
    %v216 = vadd.f32 %v53, %v212
    %v217 = vpack.c.bf16 %v216, %v215
    %v219 = vunpack.c.l.b16 %v217
    %v220 = vunpack.c.h.b16 %v217
    %v221 = vpack.c.b16 %v219, %v219
    %v222 = vpack.c.b16 %v220, %v220
    %225 = vst [vmem:[#allocation7] sm:$0xf] %v221
    %226 = vst [vmem:[#allocation7 + $0x4] sm:$0xf] %v222
    // Predicated region
    $region30: #{tpu_custom_call.1} parent=1 // pred_check
      _
    $region31: #{tpu_custom_call.1} parent=1 // pred_check_branch
      %228 = sbr.rel (0) target = $region33
    $region32: #{tpu_custom_call.1} parent=1 // pred_region
      %s230 = ssub.s32 128, 128
      %231 = vsyncadd [#allocation4], %s230
      %s232 = sshll.u32 [#allocation7], 4
      %s233 = int_to_ptr.vmem [resolvable:$true] %s232
      %238 = dma.vmem_to_hbm [thread:$0]  %s233, 128, %s5, [#allocation4], 64, 64, 4
    $region33: #{tpu_custom_call.1} parent=1 // pred_fallthru
      _
    // Predicated region
    $region34: #{tpu_custom_call.1} parent=1 // pred_check
      _
    $region35: #{tpu_custom_call.1} parent=1 // pred_check_branch
      %240 = sbr.rel (0) target = $region37
    $region36: #{tpu_custom_call.1} parent=1 // pred_region
      %241 = dma.done [#allocation4], 128
    $region37: #{tpu_custom_call.1} parent=1 // pred_fallthru
      _
    %242 = vsyncpa [#allocation3], 1
    %243 = vsyncpa [#allocation6], 1
    %244 = vsyncpa [#allocation4], 1

</llo_original>
